<compile_context>
chip_gen: v7x
topology: tpu7x:2x2x1
jax: 0.10.0
libtpu: 0.0.40
codegen_flags: <defaults>
</compile_context>

<pallas_src>
import functools
import math

import jax
import jax.numpy as jnp
import numpy as np
from jax.experimental import pallas as pl
from jax.experimental.pallas import tpu as pltpu


def _stripe_bounds(levels, W):
    """Static per-level stripe boundaries clipped to [0, W) + padding flags."""
    out = []
    for L in levels:
        w_kernel = int(math.ceil(W / L))
        w_pad1 = int(math.floor((w_kernel * L - W) / 2))
        stripes = []
        for j in range(L):
            start = j * w_kernel - w_pad1
            end = start + w_kernel
            s, e = max(start, 0), min(end, W)
            touches_pad = (s > start) or (e < end)
            stripes.append((s, e, touches_pad, w_kernel))
        out.append(stripes)
    return out


def _avg_weight_matrix(levels, H, W):
    """(H*W, total_L): 1/(H*w_kernel) at positions h*W+w inside each stripe, else 0.

    AvgPool2d default count_include_pad=True -> divide by the full kernel size, and
    the explicitly zero-padded columns contribute 0 to the sum (weight 0 here)."""
    total_L = sum(levels)
    wmat = np.zeros((H * W, total_L), dtype=np.float32)
    col = 0
    for stripes in _stripe_bounds(levels, W):
        for (s, e, _touch, w_kernel) in stripes:
            if e > s:
                scale = 1.0 / float(H * w_kernel)
                for h in range(H):
                    wmat[h * W + s:h * W + e, col] = scale
            col += 1
    return wmat


def _tpp_max_kernel(x_ref, widx_ref, o_ref, *, levels, W):
    """x_ref: (tile_nc, H*W) native-layout block; widx_ref: (1, H*W) w-index of each
    lane; o_ref: (tile_nc, total_L)."""
    x = x_ref[...]                                    # (T, H*W), native dtype
    w_idx = widx_ref[...]                             # (1, H*W) int32, value = w of h*W+w
    T = x.shape[0]
    total_L = o_ref.shape[-1]

    if jnp.issubdtype(x.dtype, jnp.floating):
        fill = jnp.asarray(-jnp.inf, dtype=x.dtype)
    else:
        fill = jnp.asarray(jnp.iinfo(x.dtype).min, dtype=x.dtype)
    zero_col = jnp.zeros((T, 1), dtype=x.dtype)

    out = jnp.zeros((T, total_L), dtype=o_ref.dtype)
    col_idx = jax.lax.broadcasted_iota(jnp.int32, (1, total_L), 1)

    col = 0
    for stripes in _stripe_bounds(levels, W):
        for (s, e, touches_pad, _wk) in stripes:
            if e > s:
                m = (w_idx >= s) & (w_idx < e)                              # (1, H*W)
                # mask spans all h rows of the stripe -> H and W reductions fused
                v = jnp.max(jnp.where(m, x, fill), axis=-1, keepdims=True)  # (T, 1)
                if touches_pad:
                    # PyTorch zero-pads before MaxPool2d: padded zeros join the max.
                    v = jnp.maximum(v, zero_col)
            else:
                v = zero_col                               # stripe fully inside padding
            out = jnp.where(col_idx == col, v.astype(o_ref.dtype), out)
            col += 1
    o_ref[...] = out                                       # single full-block store


def _tpp_avg_kernel(x_ref, w_ref, o_ref):
    """x_ref: (tile_nc, H*W); w_ref: (H*W, total_L) static weights; o_ref: (tile_nc, total_L)."""
    o_ref[...] = jnp.dot(
        x_ref[...], w_ref[...], preferred_element_type=jnp.float32
    ).astype(o_ref.dtype)


def temporal_pyramid_pool(x, levels, mode="max"):
    """JAX wrapper reproducing TemporalPyramidPooling.forward.

    x: (N, C, H, W)  ->  (N, sum(C * level for level in levels))
    """
    levels = tuple(int(l) for l in levels)
    if mode not in ("max", "avg"):
        raise RuntimeError('Unknown pooling type: %s, please use "max" or "avg".' % mode)

    N, C, H, W = x.shape
    NC, HW = N * C, H * W
    total_L = sum(levels)
    itemsize = x.dtype.itemsize

    # ---- generation-aware VMEM budget (v7x has only 64 MiB / TC; v5e/v6e 128 MiB) ----
    try:
        vmem_cap = int(pltpu.get_tpu_info().vmem_capacity_bytes)
    except Exception:
        vmem_cap = 128 * 1024 * 1024
    vmem_limit = int(min(64 * 1024 * 1024, (vmem_cap * 3) // 4))   # 48 MiB on v7x
    budget = max(2 * 1024 * 1024, vmem_cap // 8)                    # per-block input budget

    # ---- tile the N*C (sublane) axis; H*W stays contiguous on the lane axis ----
    hw_lane_pad = pl.cdiv(HW, 128) * 128          # VMEM lane padding of one row
    row_bytes = hw_lane_pad * itemsize
    if NC <= 8:
        tile_nc = NC                              # full-dim block is always legal
    else:
        tile_nc = max(8, (budget // row_bytes) // 8 * 8)
        # Keep >= 2 grid steps when possible: restores double-buffered DMA/compute
        # overlap everywhere and lets the v7x megacore shard the parallel axis.
        tile_nc = min(tile_nc,
                      pl.cdiv(pl.cdiv(NC, 2), 8) * 8,
                      pl.cdiv(NC, 8) * 8)
    grid = (pl.cdiv(NC, tile_nc),)
    # TODO(synk): for very large H*W (a single 8-row block exceeding the VMEM budget),
    # add a second "arbitrary" grid axis over H with an accumulator scratch.

    # Native layout: (N, C, H, W) -> (N*C, H*W) is a free contiguous reshape (bitcast).
    # No HBM transpose, no jnp.pad: the uneven N*C tail block is masked by Pallas.
    x2 = x.reshape(NC, HW)

    x_spec = pl.BlockSpec((tile_nc, HW), lambda i: (i, 0))
    o_spec = pl.BlockSpec((tile_nc, total_L), lambda i: (i, 0))

    cparams = pltpu.CompilerParams(
        dimension_semantics=("parallel",),
        vmem_limit_bytes=vmem_limit,
    )
    cost = pl.CostEstimate(
        flops=2 * NC * HW * total_L,
        transcendentals=0,
        bytes_accessed=NC * HW * itemsize + NC * total_L * itemsize,
    )

    if mode == "max":
        # tiny (1, H*W) lookup of the w-coordinate of each lane (avoids in-kernel mod).
        w_idx = jnp.asarray(np.tile(np.arange(W, dtype=np.int32), H)[None, :])
        widx_spec = pl.BlockSpec((1, HW), lambda i: (0, 0))
        out = pl.pallas_call(
            functools.partial(_tpp_max_kernel, levels=levels, W=W),
            out_shape=jax.ShapeDtypeStruct((NC, total_L), x.dtype),
            grid=grid,
            in_specs=[x_spec, widx_spec],
            out_specs=o_spec,
            compiler_params=cparams,
            cost_estimate=cost,
        )(x2, w_idx)
    else:  # avg
        wmat = jnp.asarray(_avg_weight_matrix(levels, H, W))          # (H*W, total_L)
        w_spec = pl.BlockSpec((HW, total_L), lambda i: (0, 0))        # fetched once
        out = pl.pallas_call(
            _tpp_avg_kernel,
            out_shape=jax.ShapeDtypeStruct((NC, total_L), x.dtype),
            grid=grid,
            in_specs=[x_spec, w_spec],
            out_specs=o_spec,
            compiler_params=cparams,
            cost_estimate=cost,
        )(x2, wmat)

    # ---- PyTorch flattening: per level (N, C, L) -> (N, C*L), concat over levels ----
    pooled = out.reshape(N, C, total_L)
    parts, off = [], 0
    for L in levels:
        parts.append(pooled[:, :, off:off + L].reshape(N, C * L))
        off += L
    return jnp.concatenate(parts, axis=1)


def _reference_tpp(x, levels, mode="max"):
    """Plain-JAX reference mirroring the PyTorch static method exactly."""
    N, C, H, W = x.shape
    outs = []
    for L in levels:
        w_kernel = int(math.ceil(W / L))
        w_pad1 = int(math.floor((w_kernel * L - W) / 2))
        w_pad2 = int(math.ceil((w_kernel * L - W) / 2))
        xp = jnp.pad(x, ((0, 0), (0, 0), (0, 0), (w_pad1, w_pad2)))
        xp = xp.reshape(N, C, H, L, w_kernel)
        if mode == "max":
            pooled = jnp.max(xp, axis=(2, 4))                        # (N, C, L)
        else:
            pooled = jnp.sum(xp, axis=(2, 4)) / float(H * w_kernel)  # (N, C, L)
        outs.append(pooled.reshape(N, C * L))
    return jnp.concatenate(outs, axis=1)


if __name__ == "__main__":
    levels = (1, 2, 3, 4)   # level 3 exercises the zero-padding path (W=16 -> pad 1+1)

    x_main = jax.random.normal(jax.random.PRNGKey(0), (2, 4, 16, 16), dtype=jnp.float32)
    # second shape exercises the uneven N*C tail (NC=12 with tile_nc=8 -> masked tail)
    x_odd = jax.random.normal(jax.random.PRNGKey(1), (3, 4, 16, 16), dtype=jnp.float32)

    ok = True
    for xin in (x_main, x_odd):
        for mode in ("max", "avg"):
            y = jax.block_until_ready(temporal_pyramid_pool(xin, levels, mode))
            y_ref = _reference_tpp(xin, levels, mode)
            assert y.shape == (xin.shape[0], xin.shape[1] * sum(levels)), y.shape
            ok &= bool(jnp.allclose(y, y_ref, atol=1e-5, rtol=1e-5))

    assert ok, "mismatch vs reference"
    print("KERNEL_OK")
</pallas_src>

<mosaic_0001>
module attributes {stable_mosaic.version = 11 : i64} {
  func.func @_tpp_max_kernel(%arg0: i32, %arg1: memref<8x256xf32, #tpu.memory_space<vmem>>, %arg2: memref<1x256xi32, #tpu.memory_space<vmem>>, %arg3: memref<8x10xf32, #tpu.memory_space<vmem>>) attributes {dimension_semantics = [#tpu.dimension_semantics<parallel>], iteration_bounds = array<i64: 1>, scalar_prefetch = 0 : i64, scratch_operands = 0 : i64, tpu.core_type = #tpu.core_type<tc>, window_params = [{transform_indices = @transform_0, window_bounds = array<i64: 8, 256>}, {pipeline_mode = #tpu.pipeline_mode<synchronous>, transform_indices = @transform_1, window_bounds = array<i64: 1, 256>}, {transform_indices = @transform_2, window_bounds = array<i64: 8, 10>}]} {
    %c0 = arith.constant 0 : index
    %c0_0 = arith.constant 0 : index
    %0 = vector.load %arg1[%c0, %c0_0] : memref<8x256xf32, #tpu.memory_space<vmem>>, vector<8x256xf32>
    %c0_1 = arith.constant 0 : index
    %c0_2 = arith.constant 0 : index
    %1 = vector.load %arg2[%c0_1, %c0_2] : memref<1x256xi32, #tpu.memory_space<vmem>>, vector<1x256xi32>
    %cst = arith.constant 0.000000e+00 : f32
    %2 = vector.broadcast %cst : f32 to vector<8x1xf32>
    %cst_3 = arith.constant 0.000000e+00 : f32
    %3 = vector.broadcast %cst_3 : f32 to vector<8x10xf32>
    %4 = tpu.iota {dimensions = array<i32: 1>} : vector<1x10xi32>
    %c0_i32 = arith.constant 0 : i32
    %5 = vector.broadcast %c0_i32 : i32 to vector<1x256xi32>
    %6 = arith.cmpi sge, %1, %5 : vector<1x256xi32>
    %c16_i32 = arith.constant 16 : i32
    %7 = vector.broadcast %c16_i32 : i32 to vector<1x256xi32>
    %8 = arith.cmpi slt, %1, %7 : vector<1x256xi32>
    %9 = arith.andi %6, %8 : vector<1x256xi1>
    %cst_4 = arith.constant 0xFF800000 : f32
    %10 = vector.shape_cast %9 : vector<1x256xi1> to vector<1x256xi1>
    %11 = vector.broadcast %10 : vector<1x256xi1> to vector<8x256xi1>
    %12 = vector.broadcast %cst_4 : f32 to vector<8x256xf32>
    %13 = arith.select %11, %0, %12 : vector<8x256xi1>, vector<8x256xf32>
    %cst_5 = arith.constant dense<0xFF800000> : vector<8xf32>
    %14 = vector.multi_reduction <maximumf>, %13, %cst_5 [1] : vector<8x256xf32> to vector<8xf32>
    %15 = vector.shape_cast %14 : vector<8xf32> to vector<8x1xf32>
    %c0_i32_6 = arith.constant 0 : i32
    %16 = vector.broadcast %c0_i32_6 : i32 to vector<1x10xi32>
    %17 = arith.cmpi eq, %4, %16 : vector<1x10xi32>
    %18 = vector.shape_cast %17 : vector<1x10xi1> to vector<1x10xi1>
    %19 = vector.broadcast %18 : vector<1x10xi1> to vector<8x10xi1>
    %20 = vector.shape_cast %15 : vector<8x1xf32> to vector<8x1xf32>
    %21 = vector.broadcast %20 : vector<8x1xf32> to vector<8x10xf32>
    %22 = arith.select %19, %21, %3 : vector<8x10xi1>, vector<8x10xf32>
    %c0_i32_7 = arith.constant 0 : i32
    %23 = vector.broadcast %c0_i32_7 : i32 to vector<1x256xi32>
    %24 = arith.cmpi sge, %1, %23 : vector<1x256xi32>
    %c8_i32 = arith.constant 8 : i32
    %25 = vector.broadcast %c8_i32 : i32 to vector<1x256xi32>
    %26 = arith.cmpi slt, %1, %25 : vector<1x256xi32>
    %27 = arith.andi %24, %26 : vector<1x256xi1>
    %cst_8 = arith.constant 0xFF800000 : f32
    %28 = vector.shape_cast %27 : vector<1x256xi1> to vector<1x256xi1>
    %29 = vector.broadcast %28 : vector<1x256xi1> to vector<8x256xi1>
    %30 = vector.broadcast %cst_8 : f32 to vector<8x256xf32>
    %31 = arith.select %29, %0, %30 : vector<8x256xi1>, vector<8x256xf32>
    %cst_9 = arith.constant dense<0xFF800000> : vector<8xf32>
    %32 = vector.multi_reduction <maximumf>, %31, %cst_9 [1] : vector<8x256xf32> to vector<8xf32>
    %33 = vector.shape_cast %32 : vector<8xf32> to vector<8x1xf32>
    %c1_i32 = arith.constant 1 : i32
    %34 = vector.broadcast %c1_i32 : i32 to vector<1x10xi32>
    %35 = arith.cmpi eq, %4, %34 : vector<1x10xi32>
    %36 = vector.shape_cast %35 : vector<1x10xi1> to vector<1x10xi1>
    %37 = vector.broadcast %36 : vector<1x10xi1> to vector<8x10xi1>
    %38 = vector.shape_cast %33 : vector<8x1xf32> to vector<8x1xf32>
    %39 = vector.broadcast %38 : vector<8x1xf32> to vector<8x10xf32>
    %40 = arith.select %37, %39, %22 : vector<8x10xi1>, vector<8x10xf32>
    %c8_i32_10 = arith.constant 8 : i32
    %41 = vector.broadcast %c8_i32_10 : i32 to vector<1x256xi32>
    %42 = arith.cmpi sge, %1, %41 : vector<1x256xi32>
    %c16_i32_11 = arith.constant 16 : i32
    %43 = vector.broadcast %c16_i32_11 : i32 to vector<1x256xi32>
    %44 = arith.cmpi slt, %1, %43 : vector<1x256xi32>
    %45 = arith.andi %42, %44 : vector<1x256xi1>
    %cst_12 = arith.constant 0xFF800000 : f32
    %46 = vector.shape_cast %45 : vector<1x256xi1> to vector<1x256xi1>
    %47 = vector.broadcast %46 : vector<1x256xi1> to vector<8x256xi1>
    %48 = vector.broadcast %cst_12 : f32 to vector<8x256xf32>
    %49 = arith.select %47, %0, %48 : vector<8x256xi1>, vector<8x256xf32>
    %cst_13 = arith.constant dense<0xFF800000> : vector<8xf32>
    %50 = vector.multi_reduction <maximumf>, %49, %cst_13 [1] : vector<8x256xf32> to vector<8xf32>
    %51 = vector.shape_cast %50 : vector<8xf32> to vector<8x1xf32>
    %c2_i32 = arith.constant 2 : i32
    %52 = vector.broadcast %c2_i32 : i32 to vector<1x10xi32>
    %53 = arith.cmpi eq, %4, %52 : vector<1x10xi32>
    %54 = vector.shape_cast %53 : vector<1x10xi1> to vector<1x10xi1>
    %55 = vector.broadcast %54 : vector<1x10xi1> to vector<8x10xi1>
    %56 = vector.shape_cast %51 : vector<8x1xf32> to vector<8x1xf32>
    %57 = vector.broadcast %56 : vector<8x1xf32> to vector<8x10xf32>
    %58 = arith.select %55, %57, %40 : vector<8x10xi1>, vector<8x10xf32>
    %c0_i32_14 = arith.constant 0 : i32
    %59 = vector.broadcast %c0_i32_14 : i32 to vector<1x256xi32>
    %60 = arith.cmpi sge, %1, %59 : vector<1x256xi32>
    %c5_i32 = arith.constant 5 : i32
    %61 = vector.broadcast %c5_i32 : i32 to vector<1x256xi32>
    %62 = arith.cmpi slt, %1, %61 : vector<1x256xi32>
    %63 = arith.andi %60, %62 : vector<1x256xi1>
    %cst_15 = arith.constant 0xFF800000 : f32
    %64 = vector.shape_cast %63 : vector<1x256xi1> to vector<1x256xi1>
    %65 = vector.broadcast %64 : vector<1x256xi1> to vector<8x256xi1>
    %66 = vector.broadcast %cst_15 : f32 to vector<8x256xf32>
    %67 = arith.select %65, %0, %66 : vector<8x256xi1>, vector<8x256xf32>
    %cst_16 = arith.constant dense<0xFF800000> : vector<8xf32>
    %68 = vector.multi_reduction <maximumf>, %67, %cst_16 [1] : vector<8x256xf32> to vector<8xf32>
    %69 = vector.shape_cast %68 : vector<8xf32> to vector<8x1xf32>
    %70 = arith.maximumf %69, %2 : vector<8x1xf32>
    %c3_i32 = arith.constant 3 : i32
    %71 = vector.broadcast %c3_i32 : i32 to vector<1x10xi32>
    %72 = arith.cmpi eq, %4, %71 : vector<1x10xi32>
    %73 = vector.shape_cast %72 : vector<1x10xi1> to vector<1x10xi1>
    %74 = vector.broadcast %73 : vector<1x10xi1> to vector<8x10xi1>
    %75 = vector.shape_cast %70 : vector<8x1xf32> to vector<8x1xf32>
    %76 = vector.broadcast %75 : vector<8x1xf32> to vector<8x10xf32>
    %77 = arith.select %74, %76, %58 : vector<8x10xi1>, vector<8x10xf32>
    %c5_i32_17 = arith.constant 5 : i32
    %78 = vector.broadcast %c5_i32_17 : i32 to vector<1x256xi32>
    %79 = arith.cmpi sge, %1, %78 : vector<1x256xi32>
    %c11_i32 = arith.constant 11 : i32
    %80 = vector.broadcast %c11_i32 : i32 to vector<1x256xi32>
    %81 = arith.cmpi slt, %1, %80 : vector<1x256xi32>
    %82 = arith.andi %79, %81 : vector<1x256xi1>
    %cst_18 = arith.constant 0xFF800000 : f32
    %83 = vector.shape_cast %82 : vector<1x256xi1> to vector<1x256xi1>
    %84 = vector.broadcast %83 : vector<1x256xi1> to vector<8x256xi1>
    %85 = vector.broadcast %cst_18 : f32 to vector<8x256xf32>
    %86 = arith.select %84, %0, %85 : vector<8x256xi1>, vector<8x256xf32>
    %cst_19 = arith.constant dense<0xFF800000> : vector<8xf32>
    %87 = vector.multi_reduction <maximumf>, %86, %cst_19 [1] : vector<8x256xf32> to vector<8xf32>
    %88 = vector.shape_cast %87 : vector<8xf32> to vector<8x1xf32>
    %c4_i32 = arith.constant 4 : i32
    %89 = vector.broadcast %c4_i32 : i32 to vector<1x10xi32>
    %90 = arith.cmpi eq, %4, %89 : vector<1x10xi32>
    %91 = vector.shape_cast %90 : vector<1x10xi1> to vector<1x10xi1>
    %92 = vector.broadcast %91 : vector<1x10xi1> to vector<8x10xi1>
    %93 = vector.shape_cast %88 : vector<8x1xf32> to vector<8x1xf32>
    %94 = vector.broadcast %93 : vector<8x1xf32> to vector<8x10xf32>
    %95 = arith.select %92, %94, %77 : vector<8x10xi1>, vector<8x10xf32>
    %c11_i32_20 = arith.constant 11 : i32
    %96 = vector.broadcast %c11_i32_20 : i32 to vector<1x256xi32>
    %97 = arith.cmpi sge, %1, %96 : vector<1x256xi32>
    %c16_i32_21 = arith.constant 16 : i32
    %98 = vector.broadcast %c16_i32_21 : i32 to vector<1x256xi32>
    %99 = arith.cmpi slt, %1, %98 : vector<1x256xi32>
    %100 = arith.andi %97, %99 : vector<1x256xi1>
    %cst_22 = arith.constant 0xFF800000 : f32
    %101 = vector.shape_cast %100 : vector<1x256xi1> to vector<1x256xi1>
    %102 = vector.broadcast %101 : vector<1x256xi1> to vector<8x256xi1>
    %103 = vector.broadcast %cst_22 : f32 to vector<8x256xf32>
    %104 = arith.select %102, %0, %103 : vector<8x256xi1>, vector<8x256xf32>
    %cst_23 = arith.constant dense<0xFF800000> : vector<8xf32>
    %105 = vector.multi_reduction <maximumf>, %104, %cst_23 [1] : vector<8x256xf32> to vector<8xf32>
    %106 = vector.shape_cast %105 : vector<8xf32> to vector<8x1xf32>
    %107 = arith.maximumf %106, %2 : vector<8x1xf32>
    %c5_i32_24 = arith.constant 5 : i32
    %108 = vector.broadcast %c5_i32_24 : i32 to vector<1x10xi32>
    %109 = arith.cmpi eq, %4, %108 : vector<1x10xi32>
    %110 = vector.shape_cast %109 : vector<1x10xi1> to vector<1x10xi1>
    %111 = vector.broadcast %110 : vector<1x10xi1> to vector<8x10xi1>
    %112 = vector.shape_cast %107 : vector<8x1xf32> to vector<8x1xf32>
    %113 = vector.broadcast %112 : vector<8x1xf32> to vector<8x10xf32>
    %114 = arith.select %111, %113, %95 : vector<8x10xi1>, vector<8x10xf32>
    %c0_i32_25 = arith.constant 0 : i32
    %115 = vector.broadcast %c0_i32_25 : i32 to vector<1x256xi32>
    %116 = arith.cmpi sge, %1, %115 : vector<1x256xi32>
    %c4_i32_26 = arith.constant 4 : i32
    %117 = vector.broadcast %c4_i32_26 : i32 to vector<1x256xi32>
    %118 = arith.cmpi slt, %1, %117 : vector<1x256xi32>
    %119 = arith.andi %116, %118 : vector<1x256xi1>
    %cst_27 = arith.constant 0xFF800000 : f32
    %120 = vector.shape_cast %119 : vector<1x256xi1> to vector<1x256xi1>
    %121 = vector.broadcast %120 : vector<1x256xi1> to vector<8x256xi1>
    %122 = vector.broadcast %cst_27 : f32 to vector<8x256xf32>
    %123 = arith.select %121, %0, %122 : vector<8x256xi1>, vector<8x256xf32>
    %cst_28 = arith.constant dense<0xFF800000> : vector<8xf32>
    %124 = vector.multi_reduction <maximumf>, %123, %cst_28 [1] : vector<8x256xf32> to vector<8xf32>
    %125 = vector.shape_cast %124 : vector<8xf32> to vector<8x1xf32>
    %c6_i32 = arith.constant 6 : i32
    %126 = vector.broadcast %c6_i32 : i32 to vector<1x10xi32>
    %127 = arith.cmpi eq, %4, %126 : vector<1x10xi32>
    %128 = vector.shape_cast %127 : vector<1x10xi1> to vector<1x10xi1>
    %129 = vector.broadcast %128 : vector<1x10xi1> to vector<8x10xi1>
    %130 = vector.shape_cast %125 : vector<8x1xf32> to vector<8x1xf32>
    %131 = vector.broadcast %130 : vector<8x1xf32> to vector<8x10xf32>
    %132 = arith.select %129, %131, %114 : vector<8x10xi1>, vector<8x10xf32>
    %c4_i32_29 = arith.constant 4 : i32
    %133 = vector.broadcast %c4_i32_29 : i32 to vector<1x256xi32>
    %134 = arith.cmpi sge, %1, %133 : vector<1x256xi32>
    %c8_i32_30 = arith.constant 8 : i32
    %135 = vector.broadcast %c8_i32_30 : i32 to vector<1x256xi32>
    %136 = arith.cmpi slt, %1, %135 : vector<1x256xi32>
    %137 = arith.andi %134, %136 : vector<1x256xi1>
    %cst_31 = arith.constant 0xFF800000 : f32
    %138 = vector.shape_cast %137 : vector<1x256xi1> to vector<1x256xi1>
    %139 = vector.broadcast %138 : vector<1x256xi1> to vector<8x256xi1>
    %140 = vector.broadcast %cst_31 : f32 to vector<8x256xf32>
    %141 = arith.select %139, %0, %140 : vector<8x256xi1>, vector<8x256xf32>
    %cst_32 = arith.constant dense<0xFF800000> : vector<8xf32>
    %142 = vector.multi_reduction <maximumf>, %141, %cst_32 [1] : vector<8x256xf32> to vector<8xf32>
    %143 = vector.shape_cast %142 : vector<8xf32> to vector<8x1xf32>
    %c7_i32 = arith.constant 7 : i32
    %144 = vector.broadcast %c7_i32 : i32 to vector<1x10xi32>
    %145 = arith.cmpi eq, %4, %144 : vector<1x10xi32>
    %146 = vector.shape_cast %145 : vector<1x10xi1> to vector<1x10xi1>
    %147 = vector.broadcast %146 : vector<1x10xi1> to vector<8x10xi1>
    %148 = vector.shape_cast %143 : vector<8x1xf32> to vector<8x1xf32>
    %149 = vector.broadcast %148 : vector<8x1xf32> to vector<8x10xf32>
    %150 = arith.select %147, %149, %132 : vector<8x10xi1>, vector<8x10xf32>
    %c8_i32_33 = arith.constant 8 : i32
    %151 = vector.broadcast %c8_i32_33 : i32 to vector<1x256xi32>
    %152 = arith.cmpi sge, %1, %151 : vector<1x256xi32>
    %c12_i32 = arith.constant 12 : i32
    %153 = vector.broadcast %c12_i32 : i32 to vector<1x256xi32>
    %154 = arith.cmpi slt, %1, %153 : vector<1x256xi32>
    %155 = arith.andi %152, %154 : vector<1x256xi1>
    %cst_34 = arith.constant 0xFF800000 : f32
    %156 = vector.shape_cast %155 : vector<1x256xi1> to vector<1x256xi1>
    %157 = vector.broadcast %156 : vector<1x256xi1> to vector<8x256xi1>
    %158 = vector.broadcast %cst_34 : f32 to vector<8x256xf32>
    %159 = arith.select %157, %0, %158 : vector<8x256xi1>, vector<8x256xf32>
    %cst_35 = arith.constant dense<0xFF800000> : vector<8xf32>
    %160 = vector.multi_reduction <maximumf>, %159, %cst_35 [1] : vector<8x256xf32> to vector<8xf32>
    %161 = vector.shape_cast %160 : vector<8xf32> to vector<8x1xf32>
    %c8_i32_36 = arith.constant 8 : i32
    %162 = vector.broadcast %c8_i32_36 : i32 to vector<1x10xi32>
    %163 = arith.cmpi eq, %4, %162 : vector<1x10xi32>
    %164 = vector.shape_cast %163 : vector<1x10xi1> to vector<1x10xi1>
    %165 = vector.broadcast %164 : vector<1x10xi1> to vector<8x10xi1>
    %166 = vector.shape_cast %161 : vector<8x1xf32> to vector<8x1xf32>
    %167 = vector.broadcast %166 : vector<8x1xf32> to vector<8x10xf32>
    %168 = arith.select %165, %167, %150 : vector<8x10xi1>, vector<8x10xf32>
    %c12_i32_37 = arith.constant 12 : i32
    %169 = vector.broadcast %c12_i32_37 : i32 to vector<1x256xi32>
    %170 = arith.cmpi sge, %1, %169 : vector<1x256xi32>
    %c16_i32_38 = arith.constant 16 : i32
    %171 = vector.broadcast %c16_i32_38 : i32 to vector<1x256xi32>
    %172 = arith.cmpi slt, %1, %171 : vector<1x256xi32>
    %173 = arith.andi %170, %172 : vector<1x256xi1>
    %cst_39 = arith.constant 0xFF800000 : f32
    %174 = vector.shape_cast %173 : vector<1x256xi1> to vector<1x256xi1>
    %175 = vector.broadcast %174 : vector<1x256xi1> to vector<8x256xi1>
    %176 = vector.broadcast %cst_39 : f32 to vector<8x256xf32>
    %177 = arith.select %175, %0, %176 : vector<8x256xi1>, vector<8x256xf32>
    %cst_40 = arith.constant dense<0xFF800000> : vector<8xf32>
    %178 = vector.multi_reduction <maximumf>, %177, %cst_40 [1] : vector<8x256xf32> to vector<8xf32>
    %179 = vector.shape_cast %178 : vector<8xf32> to vector<8x1xf32>
    %c9_i32 = arith.constant 9 : i32
    %180 = vector.broadcast %c9_i32 : i32 to vector<1x10xi32>
    %181 = arith.cmpi eq, %4, %180 : vector<1x10xi32>
    %182 = vector.shape_cast %181 : vector<1x10xi1> to vector<1x10xi1>
    %183 = vector.broadcast %182 : vector<1x10xi1> to vector<8x10xi1>
    %184 = vector.shape_cast %179 : vector<8x1xf32> to vector<8x1xf32>
    %185 = vector.broadcast %184 : vector<8x1xf32> to vector<8x10xf32>
    %186 = arith.select %183, %185, %168 : vector<8x10xi1>, vector<8x10xf32>
    %c0_41 = arith.constant 0 : index
    %c0_42 = arith.constant 0 : index
    %187 = vector.load %arg3[%c0_41, %c0_42] : memref<8x10xf32, #tpu.memory_space<vmem>>, vector<8x10xf32>
    tpu.vector_store %arg3[%c0_41, %c0_42], %186 {strides = array<i32>} : memref<8x10xf32, #tpu.memory_space<vmem>>, vector<8x10xf32>,
    return
  }
  func.func @transform_0(%arg0: i32) -> (i32, i32) {
    %c0_i32 = arith.constant 0 : i32
    %c0_i32_0 = arith.constant 0 : i32
    return %arg0, %c0_i32 : i32, i32
  }
  func.func @transform_1(%arg0: i32) -> (i32, i32) {
    %c0_i32 = arith.constant 0 : i32
    %c0_i32_0 = arith.constant 0 : i32
    %c0_i32_1 = arith.constant 0 : i32
    return %c0_i32, %c0_i32_0 : i32, i32
  }
  func.func @transform_2(%arg0: i32) -> (i32, i32) {
    %c0_i32 = arith.constant 0 : i32
    %c0_i32_0 = arith.constant 0 : i32
    return %arg0, %c0_i32 : i32, i32
  }
}

</mosaic_0001>

<llo_original>
// kernel: tpu_custom_call.1
$region0: #{tpu_custom_call.1}
  #allocation0 [shape = 'u32[]', space=smem, size = 0x4, offset = 0x4, fixed_abs, tag = 'smem constant byte address 0x4 - core index']
  #allocation1 [shape = 'u32[144,128]{1,0:T(1,128)}', space=vmem, size = 0x12000, scoped, tag = 'internal scratch']
  %s0 = inlined_call_operand.hbm [shape: f32[8,256], index: 0, kind: input, shape index: {}]
  %s1 = inlined_call_operand.hbm [shape: s32[1,256], index: 1, kind: input, shape index: {}]
  %s2 = inlined_call_operand.hbm [shape: f32[8,10], index: 2, kind: output, shape index: {}]
  %s3 = sld [smem:[#allocation0]]
  $region26: #{tpu_custom_call.1} parent=0
    _
  %s5 = ssub.s32 1, %s3
  %s6 = scalar_select 0, %s5, %s3
  $region1: #{tpu_custom_call.1} parent=0
    #allocation2 [shape = 'u8[8192]{0}', space=vmem, size = 0x2000, scoped, tag = 'input window, operand 0, single buffered']
    #allocation3 [shape = 's32[1]{0}', space=sflag, size = 0x4, scoped, tag = 'scoped memory for tpu_custom_call.1']
    #allocation4 [shape = 's32[1]{0}', space=sflag, size = 0x4, scoped, tag = 'scoped memory for tpu_custom_call.1']
    #allocation5 [shape = 'u8[1024]{0}', space=vmem, size = 0x400, scoped, tag = 'input window, operand 1, single buffered']
    #allocation6 [shape = 's32[1]{0}', space=sflag, size = 0x4, scoped, tag = 'scoped memory for tpu_custom_call.1']
    #allocation7 [shape = 'u8[4096]{0}', space=vmem, size = 0x1000, scoped, tag = 'output window, operand 0, single buffered']
    %7 = vsyncpa [#allocation3], 0
    %8 = vsyncpa [#allocation6], 0
    %9 = vsyncpa [#allocation4], 0
    // Predicated region
    $region2: #{tpu_custom_call.1} parent=1 // pred_check
      _
    $region3: #{tpu_custom_call.1} parent=1 // pred_check_branch
      %11 = sbr.rel (0) target = $region5
    $region4: #{tpu_custom_call.1} parent=1 // pred_region
      %s13 = ssub.s32 256, 256
      %14 = vsyncadd [#allocation3], %s13
      %s16 = sshll.u32 [#allocation2], 4
      %s17 = int_to_ptr.vmem [resolvable:$true] %s16
      %19 = dma.hbm_to_vmem [thread:$0]  %s0, 256, %s17, [#allocation3]
    $region5: #{tpu_custom_call.1} parent=1 // pred_fallthru
      _
    // Predicated region
    $region6: #{tpu_custom_call.1} parent=1 // pred_check
      _
    $region7: #{tpu_custom_call.1} parent=1 // pred_check_branch
      %21 = sbr.rel (0) target = $region9
    $region8: #{tpu_custom_call.1} parent=1 // pred_region
      %s23 = ssub.s32 32, 32
      %24 = vsyncadd [#allocation6], %s23
      %s26 = sshll.u32 [#allocation5], 4
      %s27 = int_to_ptr.vmem [resolvable:$true] %s26
      %29 = dma.hbm_to_vmem [thread:$0]  %s1, 32, %s27, [#allocation6]
    $region9: #{tpu_custom_call.1} parent=1 // pred_fallthru
      _
    // Predicated region
    $region10: #{tpu_custom_call.1} parent=1 // pred_check
      _
    $region11: #{tpu_custom_call.1} parent=1 // pred_check_branch
      %31 = sbr.rel (0) target = $region13
    $region12: #{tpu_custom_call.1} parent=1 // pred_region
      %32 = dma.done [#allocation3], 256
    $region13: #{tpu_custom_call.1} parent=1 // pred_fallthru
      _
    // Predicated region
    $region14: #{tpu_custom_call.1} parent=1 // pred_check
      _
    $region15: #{tpu_custom_call.1} parent=1 // pred_check_branch
      %34 = sbr.rel (0) target = $region17
    $region16: #{tpu_custom_call.1} parent=1 // pred_region
      %35 = dma.done [#allocation6], 32
    $region17: #{tpu_custom_call.1} parent=1 // pred_fallthru
      _
    %v36 = vld [vmem:[#allocation2] sm:$0xff]
    %v37 = vld [vmem:[#allocation2 + $0x8] sm:$0xff]
    %v38 = vld [vmem:[#allocation5] sm:$0x3]
    %v39 = vlaneseq
    %v40 = vand.u32 %v39, 127
    %vm41 = vcmp.ge.s32.totalorder %v38, 0
    %vm42 = vcmp.lt.s32.totalorder %v38, 16
    %vm43 = vmand %vm41, %vm42
    %v44 = vsel %vm43, 1, 0
    %v45 = vlaneseq
    %v46 = vshrl.u32 %v45, 7
    %v47 = vsub.s32 0, %v46
    %v48 = vrot.slane %v44, %v47
    %v49 = vlaneseq
    %v50 = vshrl.u32 %v49, 7
    %v51 = vsub.s32 1, %v50
    %v52 = vrot.slane %v44, %v51
    %vm53 = vcmp.eq.s32.totalorder %v48, 1
    %vm54 = vcmp.eq.s32.totalorder %v52, 1
    %v55 = vsel %vm53, %v36, -inf
    %v56 = vsel %vm54, %v37, -inf
    %v57 = vmax.f32 %v55, %v56
    %58 = vmax.xlane.f32.xlu0 %v57
    %v59 = vpop.xlane.xlu0 %58
    %vm60 = vcmp.eq.s32.totalorder %v40, 0
    %v61 = vsel %vm60, 1, 0
    %vm62 = vcmp.eq.s32.totalorder %v61, 1
    %v63 = vsel %vm62, %v59, 0.0
    %vm64 = vcmp.lt.s32.totalorder %v38, 8
    %vm65 = vmand %vm41, %vm64
    %v66 = vsel %vm65, 1, 0
    %v67 = vlaneseq
    %v68 = vshrl.u32 %v67, 7
    %v69 = vsub.s32 0, %v68
    %v70 = vrot.slane %v66, %v69
    %v71 = vlaneseq
    %v72 = vshrl.u32 %v71, 7
    %v73 = vsub.s32 1, %v72
    %v74 = vrot.slane %v66, %v73
    %vm75 = vcmp.eq.s32.totalorder %v70, 1
    %vm76 = vcmp.eq.s32.totalorder %v74, 1
    %v77 = vsel %vm75, %v36, -inf
    %v78 = vsel %vm76, %v37, -inf
    %v79 = vmax.f32 %v77, %v78
    %80 = vmax.xlane.f32.xlu0 %v79
    %v81 = vpop.xlane.xlu0 %80
    %vm82 = vcmp.eq.s32.totalorder %v40, 1
    %v83 = vsel %vm82, 1, 0
    %vm84 = vcmp.eq.s32.totalorder %v83, 1
    %v85 = vsel %vm84, %v81, %v63
    %vm86 = vcmp.ge.s32.totalorder %v38, 8
    %vm87 = vmand %vm86, %vm42
    %v88 = vsel %vm87, 1, 0
    %v89 = vlaneseq
    %v90 = vshrl.u32 %v89, 7
    %v91 = vsub.s32 0, %v90
    %v92 = vrot.slane %v88, %v91
    %v93 = vlaneseq
    %v94 = vshrl.u32 %v93, 7
    %v95 = vsub.s32 1, %v94
    %v96 = vrot.slane %v88, %v95
    %vm97 = vcmp.eq.s32.totalorder %v92, 1
    %vm98 = vcmp.eq.s32.totalorder %v96, 1
    %v99 = vsel %vm97, %v36, -inf
    %v100 = vsel %vm98, %v37, -inf
    %v101 = vmax.f32 %v99, %v100
    %102 = vmax.xlane.f32.xlu0 %v101
    %v103 = vpop.xlane.xlu0 %102
    %vm104 = vcmp.eq.s32.totalorder %v40, 2
    %v105 = vsel %vm104, 1, 0
    %vm106 = vcmp.eq.s32.totalorder %v105, 1
    %v107 = vsel %vm106, %v103, %v85
    %vm108 = vcmp.lt.s32.totalorder %v38, 5
    %vm109 = vmand %vm41, %vm108
    %v110 = vsel %vm109, 1, 0
    %v111 = vlaneseq
    %v112 = vshrl.u32 %v111, 7
    %v113 = vsub.s32 0, %v112
    %v114 = vrot.slane %v110, %v113
    %v115 = vlaneseq
    %v116 = vshrl.u32 %v115, 7
    %v117 = vsub.s32 1, %v116
    %v118 = vrot.slane %v110, %v117
    %vm119 = vcmp.eq.s32.totalorder %v114, 1
    %vm120 = vcmp.eq.s32.totalorder %v118, 1
    %v121 = vsel %vm119, %v36, -inf
    %v122 = vsel %vm120, %v37, -inf
    %v123 = vmax.f32 %v121, %v122
    %124 = vmax.xlane.f32.xlu0 %v123
    %v125 = vpop.xlane.xlu0 %124
    %v126 = vmax.f32 %v125, 0.0
    %vm127 = vcmp.eq.s32.totalorder %v40, 3
    %v128 = vsel %vm127, 1, 0
    %vm129 = vcmp.eq.s32.totalorder %v128, 1
    %v130 = vsel %vm129, %v126, %v107
    %vm131 = vcmp.ge.s32.totalorder %v38, 5
    %vm132 = vcmp.lt.s32.totalorder %v38, 11
    %vm133 = vmand %vm131, %vm132
    %v134 = vsel %vm133, 1, 0
    %v135 = vlaneseq
    %v136 = vshrl.u32 %v135, 7
    %v137 = vsub.s32 0, %v136
    %v138 = vrot.slane %v134, %v137
    %v139 = vlaneseq
    %v140 = vshrl.u32 %v139, 7
    %v141 = vsub.s32 1, %v140
    %v142 = vrot.slane %v134, %v141
    %vm143 = vcmp.eq.s32.totalorder %v138, 1
    %vm144 = vcmp.eq.s32.totalorder %v142, 1
    %v145 = vsel %vm143, %v36, -inf
    %v146 = vsel %vm144, %v37, -inf
    %v147 = vmax.f32 %v145, %v146
    %148 = vmax.xlane.f32.xlu0 %v147
    %v149 = vpop.xlane.xlu0 %148
    %vm150 = vcmp.eq.s32.totalorder %v40, 4
    %v151 = vsel %vm150, 1, 0
    %vm152 = vcmp.eq.s32.totalorder %v151, 1
    %v153 = vsel %vm152, %v149, %v130
    %vm154 = vcmp.ge.s32.totalorder %v38, 11
    %vm155 = vmand %vm154, %vm42
    %v156 = vsel %vm155, 1, 0
    %v157 = vlaneseq
    %v158 = vshrl.u32 %v157, 7
    %v159 = vsub.s32 0, %v158
    %v160 = vrot.slane %v156, %v159
    %v161 = vlaneseq
    %v162 = vshrl.u32 %v161, 7
    %v163 = vsub.s32 1, %v162
    %v164 = vrot.slane %v156, %v163
    %vm165 = vcmp.eq.s32.totalorder %v160, 1
    %vm166 = vcmp.eq.s32.totalorder %v164, 1
    %v167 = vsel %vm165, %v36, -inf
    %v168 = vsel %vm166, %v37, -inf
    %v169 = vmax.f32 %v167, %v168
    %170 = vmax.xlane.f32.xlu0 %v169
    %v171 = vpop.xlane.xlu0 %170
    %v172 = vmax.f32 %v171, 0.0
    %vm173 = vcmp.eq.s32.totalorder %v40, 5
    %v174 = vsel %vm173, 1, 0
    %vm175 = vcmp.eq.s32.totalorder %v174, 1
    %v176 = vsel %vm175, %v172, %v153
    %vm177 = vcmp.lt.s32.totalorder %v38, 4
    %vm178 = vmand %vm41, %vm177
    %v179 = vsel %vm178, 1, 0
    %v180 = vlaneseq
    %v181 = vshrl.u32 %v180, 7
    %v182 = vsub.s32 0, %v181
    %v183 = vrot.slane %v179, %v182
    %v184 = vlaneseq
    %v185 = vshrl.u32 %v184, 7
    %v186 = vsub.s32 1, %v185
    %v187 = vrot.slane %v179, %v186
    %vm188 = vcmp.eq.s32.totalorder %v183, 1
    %vm189 = vcmp.eq.s32.totalorder %v187, 1
    %v190 = vsel %vm188, %v36, -inf
    %v191 = vsel %vm189, %v37, -inf
    %v192 = vmax.f32 %v190, %v191
    %193 = vmax.xlane.f32.xlu0 %v192
    %v194 = vpop.xlane.xlu0 %193
    %vm195 = vcmp.eq.s32.totalorder %v40, 6
    %v196 = vsel %vm195, 1, 0
    %vm197 = vcmp.eq.s32.totalorder %v196, 1
    %v198 = vsel %vm197, %v194, %v176
    %vm199 = vcmp.ge.s32.totalorder %v38, 4
    %vm200 = vmand %vm199, %vm64
    %v201 = vsel %vm200, 1, 0
    %v202 = vlaneseq
    %v203 = vshrl.u32 %v202, 7
    %v204 = vsub.s32 0, %v203
    %v205 = vrot.slane %v201, %v204
    %v206 = vlaneseq
    %v207 = vshrl.u32 %v206, 7
    %v208 = vsub.s32 1, %v207
    %v209 = vrot.slane %v201, %v208
    %vm210 = vcmp.eq.s32.totalorder %v205, 1
    %vm211 = vcmp.eq.s32.totalorder %v209, 1
    %v212 = vsel %vm210, %v36, -inf
    %v213 = vsel %vm211, %v37, -inf
    %v214 = vmax.f32 %v212, %v213
    %215 = vmax.xlane.f32.xlu0 %v214
    %v216 = vpop.xlane.xlu0 %215
    %vm217 = vcmp.eq.s32.totalorder %v40, 7
    %v218 = vsel %vm217, 1, 0
    %vm219 = vcmp.eq.s32.totalorder %v218, 1
    %v220 = vsel %vm219, %v216, %v198
    %vm221 = vcmp.lt.s32.totalorder %v38, 12
    %vm222 = vmand %vm86, %vm221
    %v223 = vsel %vm222, 1, 0
    %v224 = vlaneseq
    %v225 = vshrl.u32 %v224, 7
    %v226 = vsub.s32 0, %v225
    %v227 = vrot.slane %v223, %v226
    %v228 = vlaneseq
    %v229 = vshrl.u32 %v228, 7
    %v230 = vsub.s32 1, %v229
    %v231 = vrot.slane %v223, %v230
    %vm232 = vcmp.eq.s32.totalorder %v227, 1
    %vm233 = vcmp.eq.s32.totalorder %v231, 1
    %v234 = vsel %vm232, %v36, -inf
    %v235 = vsel %vm233, %v37, -inf
    %v236 = vmax.f32 %v234, %v235
    %237 = vmax.xlane.f32.xlu0 %v236
    %v238 = vpop.xlane.xlu0 %237
    %vm239 = vcmp.eq.s32.totalorder %v40, 8
    %v240 = vsel %vm239, 1, 0
    %vm241 = vcmp.eq.s32.totalorder %v240, 1
    %v242 = vsel %vm241, %v238, %v220
    %vm243 = vcmp.ge.s32.totalorder %v38, 12
    %vm244 = vmand %vm243, %vm42
    %v245 = vsel %vm244, 1, 0
    %v246 = vlaneseq
    %v247 = vshrl.u32 %v246, 7
    %v248 = vsub.s32 0, %v247
    %v249 = vrot.slane %v245, %v248
    %v250 = vlaneseq
    %v251 = vshrl.u32 %v250, 7
    %v252 = vsub.s32 1, %v251
    %v253 = vrot.slane %v245, %v252
    %vm254 = vcmp.eq.s32.totalorder %v249, 1
    %vm255 = vcmp.eq.s32.totalorder %v253, 1
    %v256 = vsel %vm254, %v36, -inf
    %v257 = vsel %vm255, %v37, -inf
    %v258 = vmax.f32 %v256, %v257
    %259 = vmax.xlane.f32.xlu0 %v258
    %v260 = vpop.xlane.xlu0 %259
    %vm261 = vcmp.eq.s32.totalorder %v40, 9
    %v262 = vsel %vm261, 1, 0
    %vm263 = vcmp.eq.s32.totalorder %v262, 1
    %v264 = vsel %vm263, %v260, %v242
    %vm265 = vcmask 80896
    %266 = vst.msk [vmem:[#allocation7] sm:$0xff] %vm265, %v264
    // Predicated region
    $region18: #{tpu_custom_call.1} parent=1 // pred_check
      _
    $region19: #{tpu_custom_call.1} parent=1 // pred_check_branch
      %268 = sbr.rel (0) target = $region21
    $region20: #{tpu_custom_call.1} parent=1 // pred_region
      %s270 = ssub.s32 128, 128
      %271 = vsyncadd [#allocation4], %s270
      %s273 = sshll.u32 [#allocation7], 4
      %s274 = int_to_ptr.vmem [resolvable:$true] %s273
      %276 = dma.vmem_to_hbm [thread:$0]  %s274, 128, %s2, [#allocation4]
    $region21: #{tpu_custom_call.1} parent=1 // pred_fallthru
      _
    // Predicated region
    $region22: #{tpu_custom_call.1} parent=1 // pred_check
      _
    $region23: #{tpu_custom_call.1} parent=1 // pred_check_branch
      %278 = sbr.rel (0) target = $region25
    $region24: #{tpu_custom_call.1} parent=1 // pred_region
      %279 = dma.done [#allocation4], 128
    $region25: #{tpu_custom_call.1} parent=1 // pred_fallthru
      _
    %280 = vsyncpa [#allocation3], 1
    %281 = vsyncpa [#allocation6], 1
    %282 = vsyncpa [#allocation4], 1

</llo_original>
